<compile_context>
chip_gen: v7x
topology: tpu7x:2x2x1
jax: 0.10.0
libtpu: 0.0.40
codegen_flags: <defaults>
</compile_context>

<pallas_src>
import jax
import jax.numpy as jnp
from jax.experimental import pallas as pl
from jax.experimental.pallas import tpu as pltpu

INPUT_SIZE = 100
HIDDEN_SIZE = 256
OUTPUT_SIZE = 100

OUT_PAD = 128  # output features padded 100 -> 128 (lane-dense, unmasked stores)


def _round_up(n, m):
    return (n + m - 1) // m * m


def mlp_kernel(x_ref, w1_ref, b1_ref, w2_ref, b2_ref, w3_ref, b3_ref, o_ref):
    # Activations cast to the weight dtype on the VPU (cheap), so the wrapper does
    # not need an extra HBM pad/cast pass over x.
    x = x_ref[...].astype(w1_ref.dtype)
    # fc1 + ReLU (MXU accumulates in f32; bias+ReLU epilogue in f32 on the VPU)
    h = jnp.dot(x, w1_ref[...], preferred_element_type=jnp.float32)
    h = jnp.maximum(h + b1_ref[...], 0.0)
    # fc2 + ReLU
    h = jnp.dot(h.astype(w2_ref.dtype), w2_ref[...], preferred_element_type=jnp.float32)
    h = jnp.maximum(h + b2_ref[...], 0.0)
    # fc3 (no activation); output columns are padded to 128 (lane-dense store)
    out = jnp.dot(h.astype(w3_ref.dtype), w3_ref[...], preferred_element_type=jnp.float32)
    o_ref[...] = (out + b3_ref[...]).astype(o_ref.dtype)


def prepare_params(params, *, use_bf16=True):
    """One-time pad + cast of the weights/biases (hoisted out of the per-call path).

    params: (w1, b1, w2, b2, w3, b3) with w stored as (in, out) so the kernel
    computes x @ W (== PyTorch x @ W.T).
    """
    w1, b1, w2, b2, w3, b3 = params
    mm = jnp.bfloat16 if use_bf16 else jnp.float32
    # Only the OUTPUT side is padded (lane-dense stores). Input K=100 needs no pad:
    # the MXU does the same number of passes for K=100 vs K=128.
    w3p = jnp.pad(w3, ((0, 0), (0, OUT_PAD - OUTPUT_SIZE)))
    b3p = jnp.pad(b3, ((0, 0), (0, OUT_PAD - OUTPUT_SIZE)))
    return (
        w1.astype(mm), b1.astype(jnp.float32),
        w2.astype(mm), b2.astype(jnp.float32),
        w3p.astype(mm), b3p.astype(jnp.float32),
    )


def _choose_batch_tile(batch, batch_tile):
    """Pick (tile_rows, padded_batch): tile multiple of 8, >=2 tiles when >=16 rows
    (v7x megacore), and balanced so batch padding waste is <= 7 rows."""
    b8 = _round_up(max(batch, 1), 8)
    n_tiles = pl.cdiv(b8, batch_tile)
    if b8 >= 16:
        n_tiles = max(n_tiles, 2)  # keep both v7x TensorCores busy
    tb = _round_up(pl.cdiv(b8, n_tiles), 8)
    padded_b = _round_up(b8, tb)
    return tb, padded_b


def maze_solver_net(x, prepared_params, *, batch_tile=512):
    """Fused 3-layer MLP. x: (B, INPUT_SIZE) float32 -> (B, OUTPUT_SIZE) float32.

    `prepared_params` must come from prepare_params() (pad/cast done once upstream).
    """
    w1, b1, w2, b2, w3, b3 = prepared_params
    B = x.shape[0]

    tb, padded_b = _choose_batch_tile(B, batch_tile)
    if padded_b != B:
        x = jnp.pad(x, ((0, padded_b - B), (0, 0)))
    grid = (padded_b // tb,)

    # Weights/biases: constant index_map -> stay VMEM-resident across batch tiles.
    const = lambda shape: pl.BlockSpec(shape, lambda i: (0, 0))

    out = pl.pallas_call(
        mlp_kernel,
        out_shape=jax.ShapeDtypeStruct((padded_b, OUT_PAD), jnp.float32),
        grid=grid,
        in_specs=[
            pl.BlockSpec((tb, INPUT_SIZE), lambda i: (i, 0)),     # x: tiled over batch
            const((INPUT_SIZE, HIDDEN_SIZE)), const((1, HIDDEN_SIZE)),
            const((HIDDEN_SIZE, HIDDEN_SIZE)), const((1, HIDDEN_SIZE)),
            const((HIDDEN_SIZE, OUT_PAD)), const((1, OUT_PAD)),
        ],
        out_specs=pl.BlockSpec((tb, OUT_PAD), lambda i: (i, 0)),
        compiler_params=pltpu.CompilerParams(
            dimension_semantics=("parallel",),   # shard batch tiles across TCs on v7x
            vmem_limit_bytes=32 << 20,           # headroom for big tiles / f32 on v5e
        ),
    )(x, w1, b1, w2, b2, w3, b3)

    # Padded rows/cols are garbage (bias-valued) and are sliced off here. If a
    # downstream consumer accepts a (padded_b, 128) buffer, this slice can be skipped.
    return out[:B, :OUTPUT_SIZE]


def init_params(key):
    """Deterministic PyTorch-like init (uniform(-1/sqrt(fan_in), 1/sqrt(fan_in)))."""
    ks = jax.random.split(key, 6)

    def linear(kw, kb, fan_in, fan_out):
        bound = 1.0 / jnp.sqrt(jnp.float32(fan_in))
        # stored as (in, out) so the kernel computes x @ W (== PyTorch x @ W.T)
        w = jax.random.uniform(kw, (fan_in, fan_out), jnp.float32, -bound, bound)
        b = jax.random.uniform(kb, (1, fan_out), jnp.float32, -bound, bound)
        return w, b

    w1, b1 = linear(ks[0], ks[1], INPUT_SIZE, HIDDEN_SIZE)
    w2, b2 = linear(ks[2], ks[3], HIDDEN_SIZE, HIDDEN_SIZE)
    w3, b3 = linear(ks[4], ks[5], HIDDEN_SIZE, OUTPUT_SIZE)
    return (w1, b1, w2, b2, w3, b3)


def reference(x, params):
    w1, b1, w2, b2, w3, b3 = params
    h = jnp.maximum(x @ w1 + b1, 0.0)
    h = jnp.maximum(h @ w2 + b2, 0.0)
    return h @ w3 + b3


if __name__ == "__main__":
    key = jax.random.PRNGKey(0)
    k_params, k_x = jax.random.split(key)
    params = init_params(k_params)

    B = 10  # small demo batch; exercises batch padding (10 -> 16) and the 2-tile grid
    x = jax.random.normal(k_x, (B, INPUT_SIZE), jnp.float32)
    ref = reference(x, params)

    # Default bf16 operand path (f32 accumulation) -> loose tolerance.
    prepared_bf16 = prepare_params(params, use_bf16=True)
    out_bf16 = jax.block_until_ready(maze_solver_net(x, prepared_bf16))
    assert out_bf16.shape == (B, OUTPUT_SIZE)
    assert jnp.allclose(out_bf16, ref, atol=5e-2, rtol=5e-2)

    # Strict-accuracy f32 path for exactness check.
    prepared_f32 = prepare_params(params, use_bf16=False)
    out_f32 = jax.block_until_ready(maze_solver_net(x, prepared_f32))
    assert out_f32.shape == (B, OUTPUT_SIZE)
    assert jnp.allclose(out_f32, ref, atol=1e-4, rtol=1e-4)

    print("KERNEL_OK")
</pallas_src>

<mosaic_0001>
module attributes {stable_mosaic.version = 11 : i64} {
  func.func @mlp_kernel(%arg0: i32, %arg1: memref<8x100xf32, #tpu.memory_space<vmem>>, %arg2: memref<100x256xbf16, #tpu.memory_space<vmem>>, %arg3: memref<1x256xf32, #tpu.memory_space<vmem>>, %arg4: memref<256x256xbf16, #tpu.memory_space<vmem>>, %arg5: memref<1x256xf32, #tpu.memory_space<vmem>>, %arg6: memref<256x128xbf16, #tpu.memory_space<vmem>>, %arg7: memref<1x128xf32, #tpu.memory_space<vmem>>, %arg8: memref<8x128xf32, #tpu.memory_space<vmem>>) attributes {dimension_semantics = [#tpu.dimension_semantics<parallel>], iteration_bounds = array<i64: 2>, scalar_prefetch = 0 : i64, scratch_operands = 0 : i64, tpu.core_type = #tpu.core_type<tc>, window_params = [{transform_indices = @transform_0, window_bounds = array<i64: 8, 100>}, {pipeline_mode = #tpu.pipeline_mode<synchronous>, transform_indices = @transform_1, window_bounds = array<i64: 100, 256>}, {pipeline_mode = #tpu.pipeline_mode<synchronous>, transform_indices = @transform_2, window_bounds = array<i64: 1, 256>}, {pipeline_mode = #tpu.pipeline_mode<synchronous>, transform_indices = @transform_3, window_bounds = array<i64: 256, 256>}, {pipeline_mode = #tpu.pipeline_mode<synchronous>, transform_indices = @transform_4, window_bounds = array<i64: 1, 256>}, {pipeline_mode = #tpu.pipeline_mode<synchronous>, transform_indices = @transform_5, window_bounds = array<i64: 256, 128>}, {pipeline_mode = #tpu.pipeline_mode<synchronous>, transform_indices = @transform_6, window_bounds = array<i64: 1, 128>}, {transform_indices = @transform_7, window_bounds = array<i64: 8, 128>}]} {
    %c0 = arith.constant 0 : index
    %c0_0 = arith.constant 0 : index
    %0 = vector.load %arg1[%c0, %c0_0] : memref<8x100xf32, #tpu.memory_space<vmem>>, vector<8x100xf32>
    %1 = arith.truncf %0 : vector<8x100xf32> to vector<8x100xbf16>
    %c0_1 = arith.constant 0 : index
    %c0_2 = arith.constant 0 : index
    %2 = vector.load %arg2[%c0_1, %c0_2] : memref<100x256xbf16, #tpu.memory_space<vmem>>, vector<100x256xbf16>
    %cst = arith.constant dense<0.000000e+00> : vector<8x256xf32>
    %3 = tpu.matmul %1, %2, %cst {dimension_numbers = #tpu.dot_dimension_numbers<[1], [0], [0], [1], [0, 0, 1, 1], [], []>} : vector<8x100xbf16>, vector<100x256xbf16>, vector<8x256xf32> -> vector<8x256xf32>
    %c0_3 = arith.constant 0 : index
    %c0_4 = arith.constant 0 : index
    %4 = vector.load %arg3[%c0_3, %c0_4] : memref<1x256xf32, #tpu.memory_space<vmem>>, vector<1x256xf32>
    %5 = vector.broadcast %4 : vector<1x256xf32> to vector<8x256xf32>
    %6 = arith.addf %3, %5 : vector<8x256xf32>
    %cst_5 = arith.constant 0.000000e+00 : f32
    %7 = vector.broadcast %cst_5 : f32 to vector<8x256xf32>
    %8 = arith.maximumf %6, %7 : vector<8x256xf32>
    %9 = arith.truncf %8 : vector<8x256xf32> to vector<8x256xbf16>
    %c0_6 = arith.constant 0 : index
    %c0_7 = arith.constant 0 : index
    %10 = vector.load %arg4[%c0_6, %c0_7] : memref<256x256xbf16, #tpu.memory_space<vmem>>, vector<256x256xbf16>
    %cst_8 = arith.constant dense<0.000000e+00> : vector<8x256xf32>
    %11 = tpu.matmul %9, %10, %cst_8 {dimension_numbers = #tpu.dot_dimension_numbers<[1], [0], [0], [1], [0, 0, 1, 1], [], []>} : vector<8x256xbf16>, vector<256x256xbf16>, vector<8x256xf32> -> vector<8x256xf32>
    %c0_9 = arith.constant 0 : index
    %c0_10 = arith.constant 0 : index
    %12 = vector.load %arg5[%c0_9, %c0_10] : memref<1x256xf32, #tpu.memory_space<vmem>>, vector<1x256xf32>
    %13 = vector.broadcast %12 : vector<1x256xf32> to vector<8x256xf32>
    %14 = arith.addf %11, %13 : vector<8x256xf32>
    %cst_11 = arith.constant 0.000000e+00 : f32
    %15 = vector.broadcast %cst_11 : f32 to vector<8x256xf32>
    %16 = arith.maximumf %14, %15 : vector<8x256xf32>
    %17 = arith.truncf %16 : vector<8x256xf32> to vector<8x256xbf16>
    %c0_12 = arith.constant 0 : index
    %c0_13 = arith.constant 0 : index
    %18 = vector.load %arg6[%c0_12, %c0_13] : memref<256x128xbf16, #tpu.memory_space<vmem>>, vector<256x128xbf16>
    %cst_14 = arith.constant dense<0.000000e+00> : vector<8x128xf32>
    %19 = tpu.matmul %17, %18, %cst_14 {dimension_numbers = #tpu.dot_dimension_numbers<[1], [0], [0], [1], [0, 0, 1, 1], [], []>} : vector<8x256xbf16>, vector<256x128xbf16>, vector<8x128xf32> -> vector<8x128xf32>
    %c0_15 = arith.constant 0 : index
    %c0_16 = arith.constant 0 : index
    %20 = vector.load %arg7[%c0_15, %c0_16] : memref<1x128xf32, #tpu.memory_space<vmem>>, vector<1x128xf32>
    %21 = vector.broadcast %20 : vector<1x128xf32> to vector<8x128xf32>
    %22 = arith.addf %19, %21 : vector<8x128xf32>
    %c0_17 = arith.constant 0 : index
    %c0_18 = arith.constant 0 : index
    %23 = vector.load %arg8[%c0_17, %c0_18] : memref<8x128xf32, #tpu.memory_space<vmem>>, vector<8x128xf32>
    tpu.vector_store %arg8[%c0_17, %c0_18], %22 {strides = array<i32>} : memref<8x128xf32, #tpu.memory_space<vmem>>, vector<8x128xf32>,
    return
  }
  func.func @transform_0(%arg0: i32) -> (i32, i32) {
    %c0_i32 = arith.constant 0 : i32
    %c0_i32_0 = arith.constant 0 : i32
    return %arg0, %c0_i32 : i32, i32
  }
  func.func @transform_1(%arg0: i32) -> (i32, i32) {
    %c0_i32 = arith.constant 0 : i32
    %c0_i32_0 = arith.constant 0 : i32
    %c0_i32_1 = arith.constant 0 : i32
    return %c0_i32, %c0_i32_0 : i32, i32
  }
  func.func @transform_2(%arg0: i32) -> (i32, i32) {
    %c0_i32 = arith.constant 0 : i32
    %c0_i32_0 = arith.constant 0 : i32
    %c0_i32_1 = arith.constant 0 : i32
    return %c0_i32, %c0_i32_0 : i32, i32
  }
  func.func @transform_3(%arg0: i32) -> (i32, i32) {
    %c0_i32 = arith.constant 0 : i32
    %c0_i32_0 = arith.constant 0 : i32
    %c0_i32_1 = arith.constant 0 : i32
    return %c0_i32, %c0_i32_0 : i32, i32
  }
  func.func @transform_4(%arg0: i32) -> (i32, i32) {
    %c0_i32 = arith.constant 0 : i32
    %c0_i32_0 = arith.constant 0 : i32
    %c0_i32_1 = arith.constant 0 : i32
    return %c0_i32, %c0_i32_0 : i32, i32
  }
  func.func @transform_5(%arg0: i32) -> (i32, i32) {
    %c0_i32 = arith.constant 0 : i32
    %c0_i32_0 = arith.constant 0 : i32
    %c0_i32_1 = arith.constant 0 : i32
    return %c0_i32, %c0_i32_0 : i32, i32
  }
  func.func @transform_6(%arg0: i32) -> (i32, i32) {
    %c0_i32 = arith.constant 0 : i32
    %c0_i32_0 = arith.constant 0 : i32
    %c0_i32_1 = arith.constant 0 : i32
    return %c0_i32, %c0_i32_0 : i32, i32
  }
  func.func @transform_7(%arg0: i32) -> (i32, i32) {
    %c0_i32 = arith.constant 0 : i32
    %c0_i32_0 = arith.constant 0 : i32
    return %arg0, %c0_i32 : i32, i32
  }
}

</mosaic_0001>

<llo_original>
// kernel: tpu_custom_call.1
$region0: #{tpu_custom_call.1}
  #allocation0 [shape = 'u32[]', space=smem, size = 0x4, offset = 0x4, fixed_abs, tag = 'smem constant byte address 0x4 - core index']
  #allocation1 [shape = 'u32[144,128]{1,0:T(1,128)}', space=vmem, size = 0x12000, scoped, tag = 'internal scratch']
  %s0 = inlined_call_operand.hbm [shape: f32[16,100], index: 0, kind: input, shape index: {}]
  %s1 = inlined_call_operand.hbm [shape: bf16[100,256], index: 1, kind: input, shape index: {}]
  %s2 = inlined_call_operand.vmem [shape: f32[1,256], index: 2, kind: input, shape index: {}]
  %s3 = inlined_call_operand.hbm [shape: bf16[256,256], index: 3, kind: input, shape index: {}]
  %s4 = inlined_call_operand.vmem [shape: f32[1,256], index: 4, kind: input, shape index: {}]
  %s5 = inlined_call_operand.hbm [shape: bf16[256,128], index: 5, kind: input, shape index: {}]
  %s6 = inlined_call_operand.vmem [shape: f32[1,128], index: 6, kind: input, shape index: {}]
  %s7 = inlined_call_operand.hbm [shape: f32[16,128], index: 7, kind: output, shape index: {}]
  %s8 = sld [smem:[#allocation0]]
  $region77: #{tpu_custom_call.1} parent=0
    _
  %s10 = ssub.s32 1, %s8
  %s11 = scalar_select 0, %s10, %s8
  $region1: #{tpu_custom_call.1} parent=0
    #allocation2 [shape = 'u8[8192]{0}', space=vmem, size = 0x2000, scoped, tag = 'input window, operand 0']
    #allocation3 [shape = 's32[2]{0}', space=sflag, size = 0x8, scoped, tag = 'scoped memory for tpu_custom_call.1']
    #allocation4 [shape = 's32[2]{0}', space=sflag, size = 0x8, scoped, tag = 'scoped memory for tpu_custom_call.1']
    #allocation5 [shape = 'u8[53248]{0}', space=vmem, size = 0xd000, scoped, tag = 'input window, operand 1, single buffered']
    #allocation6 [shape = 's32[1]{0}', space=sflag, size = 0x4, scoped, tag = 'scoped memory for tpu_custom_call.1']
    #allocation7 [shape = 'u8[131072]{0}', space=vmem, size = 0x20000, scoped, tag = 'input window, operand 3, single buffered']
    #allocation8 [shape = 'u8[65536]{0}', space=vmem, size = 0x10000, scoped, tag = 'input window, operand 5, single buffered']
    #allocation9 [shape = 's32[1]{0}', space=sflag, size = 0x4, scoped, tag = 'scoped memory for tpu_custom_call.1']
    #allocation10 [shape = 'u8[8192]{0}', space=vmem, size = 0x2000, scoped, tag = 'output window, operand 0']
    %12 = vsyncpa [#allocation3], 0
    %s13 = scalar_lea.sflag [#allocation3], 1
    %14 = vsyncpa %s13, 0
    %15 = vsyncpa [#allocation6], 0
    %16 = vsyncpa [#allocation9], 0
    %17 = vsyncpa [#allocation4], 0
    %s18 = scalar_lea.sflag [#allocation4], 1
    %19 = vsyncpa %s18, 0
    loop: start=0, step=1, limit=4
    $region2: #{tpu_custom_call.1} parent=1 // loop_pre_header
      _
    $region3: #{tpu_custom_call.1} parent=1 // loop_header
      %s21 = sphi 0, %s25
      %p22 = scmp.ge.s32.totalorder %s21, 4
      %s31 = sphi 0, %s33
      %s34 = sphi 0, %s31
      %s35 = sphi 0, %s34
      %s51 = sphi 0, %s35
      %s55 = sphi 0, %s55
      %s57 = sphi 0, %s55
      %s58 = sphi 0, %s57
      %s72 = sphi 0, %s58
      %s76 = sphi 0, %s76
      %s78 = sphi 0, %s76
      %s79 = sphi 0, %s78
      %s93 = sphi 0, %s79
      %s97 = sphi 0, %s97
      %s99 = sphi 0, %s97
      %s100 = sphi 0, %s99
      %s114 = sphi 0, %s100
      %s118 = sphi 0, %s118
      %s120 = sphi 0, %s118
      %s121 = sphi 0, %s120
      %s135 = sphi 0, %s121
      %s139 = sphi 0, %s139
      %s141 = sphi 0, %s139
      %s142 = sphi 0, %s141
      %s156 = sphi 0, %s142
      %s160 = sphi 0, %s160
      %s162 = sphi 0, %s160
      %s163 = sphi 0, %s162
      %s177 = sphi 0, %s163
      %s183 = sphi 0, %s185
      %s186 = sphi 0, %s183
      %s187 = sphi 0, %s186
      %s203 = sphi 0, %s187
    $region4: #{tpu_custom_call.1} parent=1 // loop_header_branch
      %24 = sbr.rel (%p22) target = $region8
    $region5: #{tpu_custom_call.1} parent=1 // loop_body
      %s26 = ssub.s32 %s21, 1
      %s27 = ssub.s32 %s21, 2
      %s28 = sadd.s32 %s21, 1
      %s29 = ssub.s32 %s21, %s28
      %p30 = scmp.eq.s32.totalorder %s29, 0
      %s32 = sadd.s32 %s31, 1
      %s33 = scalar_select %p30, %s31, %s32
      %p36 = pneg %p30
      %p37 = scmp.eq.s32.totalorder %s21, 1
      %p38 = por %p36, %p37
      %p39 = scmp.ne.s32.totalorder %s31, %s34
      %p40 = scmp.eq.s32.totalorder %s21, 0
      %p41 = por %p39, %p40
      %p42 = scmp.ne.s32.totalorder %s31, %s34
      %p43 = scmp.eq.s32.totalorder %s26, 1
      %p44 = por %p42, %p43
      %p45 = scmp.ne.s32.totalorder %s34, %s35
      %p46 = scmp.eq.s32.totalorder %s26, 0
      %p47 = por %p45, %p46
      %p48 = scmp.ne.s32.totalorder %s34, %s35
      %p49 = scmp.eq.s32.totalorder %s27, 1
      %p50 = por %p48, %p49
      %p52 = scmp.ne.s32.totalorder %s35, %s51
      %p53 = scmp.eq.s32.totalorder %s27, 0
      %p54 = por %p52, %p53
      %s56 = sadd.s32 %s55, 1
      %p59 = scmp.eq.s32.totalorder %s21, 1
      %p60 = scmp.ne.s32.totalorder %s55, %s57
      %p61 = scmp.eq.s32.totalorder %s21, 0
      %p62 = por %p60, %p61
      %p63 = scmp.ne.s32.totalorder %s55, %s57
      %p64 = scmp.eq.s32.totalorder %s26, 1
      %p65 = por %p63, %p64
      %p66 = scmp.ne.s32.totalorder %s57, %s58
      %p67 = scmp.eq.s32.totalorder %s26, 0
      %p68 = por %p66, %p67
      %p69 = scmp.ne.s32.totalorder %s57, %s58
      %p70 = scmp.eq.s32.totalorder %s27, 1
      %p71 = por %p69, %p70
      %p73 = scmp.ne.s32.totalorder %s58, %s72
      %p74 = scmp.eq.s32.totalorder %s27, 0
      %p75 = por %p73, %p74
      %s77 = sadd.s32 %s76, 1
      %p80 = scmp.eq.s32.totalorder %s21, 1
      %p81 = scmp.ne.s32.totalorder %s76, %s78
      %p82 = scmp.eq.s32.totalorder %s21, 0
      %p83 = por %p81, %p82
      %p84 = scmp.ne.s32.totalorder %s76, %s78
      %p85 = scmp.eq.s32.totalorder %s26, 1
      %p86 = por %p84, %p85
      %p87 = scmp.ne.s32.totalorder %s78, %s79
      %p88 = scmp.eq.s32.totalorder %s26, 0
      %p89 = por %p87, %p88
      %p90 = scmp.ne.s32.totalorder %s78, %s79
      %p91 = scmp.eq.s32.totalorder %s27, 1
      %p92 = por %p90, %p91
      %p94 = scmp.ne.s32.totalorder %s79, %s93
      %p95 = scmp.eq.s32.totalorder %s27, 0
      %p96 = por %p94, %p95
      %s98 = sadd.s32 %s97, 1
      %p101 = scmp.eq.s32.totalorder %s21, 1
      %p102 = scmp.ne.s32.totalorder %s97, %s99
      %p103 = scmp.eq.s32.totalorder %s21, 0
      %p104 = por %p102, %p103
      %p105 = scmp.ne.s32.totalorder %s97, %s99
      %p106 = scmp.eq.s32.totalorder %s26, 1
      %p107 = por %p105, %p106
      %p108 = scmp.ne.s32.totalorder %s99, %s100
      %p109 = scmp.eq.s32.totalorder %s26, 0
      %p110 = por %p108, %p109
      %p111 = scmp.ne.s32.totalorder %s99, %s100
      %p112 = scmp.eq.s32.totalorder %s27, 1
      %p113 = por %p111, %p112
      %p115 = scmp.ne.s32.totalorder %s100, %s114
      %p116 = scmp.eq.s32.totalorder %s27, 0
      %p117 = por %p115, %p116
      %s119 = sadd.s32 %s118, 1
      %p122 = scmp.eq.s32.totalorder %s21, 1
      %p123 = scmp.ne.s32.totalorder %s118, %s120
      %p124 = scmp.eq.s32.totalorder %s21, 0
      %p125 = por %p123, %p124
      %p126 = scmp.ne.s32.totalorder %s118, %s120
      %p127 = scmp.eq.s32.totalorder %s26, 1
      %p128 = por %p126, %p127
      %p129 = scmp.ne.s32.totalorder %s120, %s121
      %p130 = scmp.eq.s32.totalorder %s26, 0
      %p131 = por %p129, %p130
      %p132 = scmp.ne.s32.totalorder %s120, %s121
      %p133 = scmp.eq.s32.totalorder %s27, 1
      %p134 = por %p132, %p133
      %p136 = scmp.ne.s32.totalorder %s121, %s135
      %p137 = scmp.eq.s32.totalorder %s27, 0
      %p138 = por %p136, %p137
      %s140 = sadd.s32 %s139, 1
      %p143 = scmp.eq.s32.totalorder %s21, 1
      %p144 = scmp.ne.s32.totalorder %s139, %s141
      %p145 = scmp.eq.s32.totalorder %s21, 0
      %p146 = por %p144, %p145
      %p147 = scmp.ne.s32.totalorder %s139, %s141
      %p148 = scmp.eq.s32.totalorder %s26, 1
      %p149 = por %p147, %p148
      %p150 = scmp.ne.s32.totalorder %s141, %s142
      %p151 = scmp.eq.s32.totalorder %s26, 0
      %p152 = por %p150, %p151
      %p153 = scmp.ne.s32.totalorder %s141, %s142
      %p154 = scmp.eq.s32.totalorder %s27, 1
      %p155 = por %p153, %p154
      %p157 = scmp.ne.s32.totalorder %s142, %s156
      %p158 = scmp.eq.s32.totalorder %s27, 0
      %p159 = por %p157, %p158
      %s161 = sadd.s32 %s160, 1
      %p164 = scmp.eq.s32.totalorder %s21, 1
      %p165 = scmp.ne.s32.totalorder %s160, %s162
      %p166 = scmp.eq.s32.totalorder %s21, 0
      %p167 = por %p165, %p166
      %p168 = scmp.ne.s32.totalorder %s160, %s162
      %p169 = scmp.eq.s32.totalorder %s26, 1
      %p170 = por %p168, %p169
      %p171 = scmp.ne.s32.totalorder %s162, %s163
      %p172 = scmp.eq.s32.totalorder %s26, 0
      %p173 = por %p171, %p172
      %p174 = scmp.ne.s32.totalorder %s162, %s163
      %p175 = scmp.eq.s32.totalorder %s27, 1
      %p176 = por %p174, %p175
      %p178 = scmp.ne.s32.totalorder %s163, %s177
      %p179 = scmp.eq.s32.totalorder %s27, 0
      %p180 = por %p178, %p179
      %s181 = ssub.s32 %s21, %s28
      %p182 = scmp.eq.s32.totalorder %s181, 0
      %s184 = sadd.s32 %s183, 1
      %s185 = scalar_select %p182, %s183, %s184
      %p188 = pneg %p182
      %p189 = scmp.eq.s32.totalorder %s21, 1
      %p190 = por %p188, %p189
      %p191 = scmp.ne.s32.totalorder %s183, %s186
      %p192 = scmp.eq.s32.totalorder %s21, 0
      %p193 = por %p191, %p192
      %p194 = scmp.ne.s32.totalorder %s183, %s186
      %p195 = scmp.eq.s32.totalorder %s26, 1
      %p196 = por %p194, %p195
      %p197 = scmp.ne.s32.totalorder %s186, %s187
      %p198 = scmp.eq.s32.totalorder %s26, 0
      %p199 = por %p197, %p198
      %p200 = scmp.ne.s32.totalorder %s186, %s187
      %p201 = scmp.eq.s32.totalorder %s27, 1
      %p202 = por %p200, %p201
      %p204 = scmp.ne.s32.totalorder %s187, %s203
      %p205 = scmp.eq.s32.totalorder %s27, 0
      %p206 = por %p204, %p205
      %p207 = scmp.le.s32.totalorder 1, %s21
      %p208 = scmp.lt.s32.totalorder %s21, 3
      %p209 = pnand %p207, %p208
      %p210 = pneg %p209
      // Predicated region
      $region9: #{tpu_custom_call.1} parent=5 // pred_check
        _
      $region10: #{tpu_custom_call.1} parent=5 // pred_check_branch
        %212 = sbr.rel (%p209) target = $region12
      $region11: #{tpu_custom_call.1} parent=5 // pred_region
        %s213 = ssub.s32 %s21, 1
        // Predicated region
        $region13: #{tpu_custom_call.1} parent=11 // pred_check
          %p214 = pneg %p68
        $region14: #{tpu_custom_call.1} parent=11 // pred_check_branch
          %216 = sbr.rel (%p214) target = $region16
        $region15: #{tpu_custom_call.1} parent=11 // pred_region
          %s218 = ssub.s32 1664, 1664
          %219 = vsyncadd [#allocation6], %s218
          %s220 = sshll.u32 [#allocation5], 4
          %s221 = int_to_ptr.vmem [resolvable:$true] %s220
          %226 = dma.hbm_to_vmem [thread:$0]  %s1, 1664, %s221, [#allocation6], 128, 128, 8
        $region16: #{tpu_custom_call.1} parent=11 // pred_fallthru
          _
        // Predicated region
        $region17: #{tpu_custom_call.1} parent=11 // pred_check
          %p227 = pneg %p89
        $region18: #{tpu_custom_call.1} parent=11 // pred_check_branch
          %229 = sbr.rel (%p227) target = $region20
        $region19: #{tpu_custom_call.1} parent=11 // pred_region
          _
        $region20: #{tpu_custom_call.1} parent=11 // pred_fallthru
          _
        // Predicated region
        $region21: #{tpu_custom_call.1} parent=11 // pred_check
          %p230 = pneg %p110
        $region22: #{tpu_custom_call.1} parent=11 // pred_check_branch
          %232 = sbr.rel (%p230) target = $region24
        $region23: #{tpu_custom_call.1} parent=11 // pred_region
          %s234 = ssub.s32 4096, 4096
          %235 = vsyncadd [#allocation6], %s234
          %s236 = sshll.u32 [#allocation7], 4
          %s237 = int_to_ptr.vmem [resolvable:$true] %s236
          %242 = dma.hbm_to_vmem [thread:$0]  %s3, 4096, %s237, [#allocation6], 128, 128, 8
        $region24: #{tpu_custom_call.1} parent=11 // pred_fallthru
          _
        // Predicated region
        $region25: #{tpu_custom_call.1} parent=11 // pred_check
          %p243 = pneg %p131
        $region26: #{tpu_custom_call.1} parent=11 // pred_check_branch
          %245 = sbr.rel (%p243) target = $region28
        $region27: #{tpu_custom_call.1} parent=11 // pred_region
          _
        $region28: #{tpu_custom_call.1} parent=11 // pred_fallthru
          _
        // Predicated region
        $region29: #{tpu_custom_call.1} parent=11 // pred_check
          %p246 = pneg %p152
        $region30: #{tpu_custom_call.1} parent=11 // pred_check_branch
          %248 = sbr.rel (%p246) target = $region32
        $region31: #{tpu_custom_call.1} parent=11 // pred_region
          %s250 = ssub.s32 2048, 2048
          %251 = vsyncadd [#allocation9], %s250
          %s252 = sshll.u32 [#allocation8], 4
          %s253 = int_to_ptr.vmem [resolvable:$true] %s252
          %258 = dma.hbm_to_vmem [thread:$0]  %s5, 2048, %s253, [#allocation9], 64, 64, 4
        $region32: #{tpu_custom_call.1} parent=11 // pred_fallthru
          _
        // Predicated region
        $region33: #{tpu_custom_call.1} parent=11 // pred_check
          %p259 = pneg %p173
        $region34: #{tpu_custom_call.1} parent=11 // pred_check_branch
          %261 = sbr.rel (%p259) target = $region36
        $region35: #{tpu_custom_call.1} parent=11 // pred_region
          _
        $region36: #{tpu_custom_call.1} parent=11 // pred_fallthru
          _
      $region12: #{tpu_custom_call.1} parent=5 // pred_fallthru
        _
      %p262 = scmp.lt.s32.totalorder %s21, 2
      // Predicated region
      $region37: #{tpu_custom_call.1} parent=5 // pred_check
        %p263 = pneg %p262
      $region38: #{tpu_custom_call.1} parent=5 // pred_check_branch
        %265 = sbr.rel (%p263) target = $region40
      $region39: #{tpu_custom_call.1} parent=5 // pred_region
        // Predicated region
        $region41: #{tpu_custom_call.1} parent=39 // pred_check
          %p266 = pneg %p41
        $region42: #{tpu_custom_call.1} parent=39 // pred_check_branch
          %268 = sbr.rel (%p266) target = $region44
        $region43: #{tpu_custom_call.1} parent=39 // pred_region
          %s269 = sand.u32 %s31, 1
          %s270 = scalar_lea.sflag [#allocation3], %s269
          %s271 = sand.u32 %s31, 1
          %s272 = smul.addr %s271, 8
          %s273 = scalar_lea.vmem [#allocation2], %s272
          %s275 = ssub.s32 128, 128
          %276 = vsyncadd %s270, %s275
          %s277 = smul.addr %s21, 128
          %s278 = scalar_lea.hbm %s0, %s277
          %s280 = sshll.u32 %s273, 4
          %s281 = int_to_ptr.vmem [resolvable:$true] %s280
          %283 = dma.hbm_to_vmem [thread:$0]  %s278, 128, %s281, %s270
        $region44: #{tpu_custom_call.1} parent=39 // pred_fallthru
          _
      $region40: #{tpu_custom_call.1} parent=5 // pred_fallthru
        _
      %p284 = scmp.le.s32.totalorder 1, %s21
      %p285 = scmp.lt.s32.totalorder %s21, 3
      %p286 = pnand %p284, %p285
      %p287 = pneg %p286
      // Predicated region
      $region45: #{tpu_custom_call.1} parent=5 // pred_check
        _
      $region46: #{tpu_custom_call.1} parent=5 // pred_check_branch
        %289 = sbr.rel (%p286) target = $region48
      $region47: #{tpu_custom_call.1} parent=5 // pred_region
        %s290 = ssub.s32 %s21, 1
        %s291 = sand.u32 %s34, 1
        %s292 = scalar_lea.sflag [#allocation3], %s291
        %s293 = sand.u32 %s34, 1
        %s294 = smul.addr %s293, 8
        %s295 = scalar_lea.vmem [#allocation2], %s294
        // Predicated region
        $region49: #{tpu_custom_call.1} parent=47 // pred_check
          %p296 = pneg %p47
        $region50: #{tpu_custom_call.1} parent=47 // pred_check_branch
          %298 = sbr.rel (%p296) target = $region52
        $region51: #{tpu_custom_call.1} parent=47 // pred_region
          %299 = dma.done %s292, 128
        $region52: #{tpu_custom_call.1} parent=47 // pred_fallthru
          _
        // Predicated region
        $region53: #{tpu_custom_call.1} parent=47 // pred_check
          %p300 = pneg %p68
        $region54: #{tpu_custom_call.1} parent=47 // pred_check_branch
          %302 = sbr.rel (%p300) target = $region56
        $region55: #{tpu_custom_call.1} parent=47 // pred_region
          %303 = dma.done [#allocation6], 1664
        $region56: #{tpu_custom_call.1} parent=47 // pred_fallthru
          _
        // Predicated region
        $region57: #{tpu_custom_call.1} parent=47 // pred_check
          %p304 = pneg %p110
        $region58: #{tpu_custom_call.1} parent=47 // pred_check_branch
          %306 = sbr.rel (%p304) target = $region60
        $region59: #{tpu_custom_call.1} parent=47 // pred_region
          %307 = dma.done [#allocation6], 4096
        $region60: #{tpu_custom_call.1} parent=47 // pred_fallthru
          _
        // Predicated region
        $region61: #{tpu_custom_call.1} parent=47 // pred_check
          %p308 = pneg %p152
        $region62: #{tpu_custom_call.1} parent=47 // pred_check_branch
          %310 = sbr.rel (%p308) target = $region64
        $region63: #{tpu_custom_call.1} parent=47 // pred_region
          %311 = dma.done [#allocation9], 2048
        $region64: #{tpu_custom_call.1} parent=47 // pred_fallthru
          _
        %s312 = sand.u32 %s34, 1
        %s313 = scalar_lea.sflag [#allocation3], %s312
        %s314 = sand.u32 %s34, 1
        %s315 = smul.addr %s314, 8
        %s316 = scalar_lea.vmem [#allocation2], %s315
        %p317 = pneg %p47
        %p318 = pneg %p44
        %p319 = pneg %p68
        %p320 = pneg %p65
        %p321 = pneg %p89
        %p322 = pneg %p86
        %p323 = pneg %p110
        %p324 = pneg %p107
        %p325 = pneg %p131
        %p326 = pneg %p128
        %p327 = pneg %p152
        %p328 = pneg %p149
        %p329 = pneg %p173
        %p330 = pneg %p170
        %p331 = pneg %p199
        %p332 = pneg %p196
        %s333 = sand.u32 %s186, 1
        %s334 = scalar_lea.sflag [#allocation4], %s333
        %s335 = sand.u32 %s186, 1
        %s336 = smul.addr %s335, 8
        %s337 = scalar_lea.vmem [#allocation10], %s336
        %v339 = vld [vmem:[%s295] sm:$0xff]
        %v340 = vpack.c.bf16 %v339, %v339
        %v341 = vld [vmem:[#allocation5] sm:$0xff]
        %v342 = vld [vmem:[#allocation5 + $0x8] sm:$0xff]
        %v343 = vld [vmem:[#allocation5 + $0x10] sm:$0xff]
        %v344 = vld [vmem:[#allocation5 + $0x18] sm:$0xff]
        %v345 = vld [vmem:[#allocation5 + $0x20] sm:$0xff]
        %v346 = vld [vmem:[#allocation5 + $0x28] sm:$0xff]
        %v347 = vld [vmem:[#allocation5 + $0x30] sm:$0xff]
        %v348 = vld [vmem:[#allocation5 + $0x38] sm:$0xff]
        %v349 = vld [vmem:[#allocation5 + $0x40] sm:$0xff]
        %v350 = vld [vmem:[#allocation5 + $0x48] sm:$0xff]
        %v351 = vld [vmem:[#allocation5 + $0x50] sm:$0xff]
        %v352 = vld [vmem:[#allocation5 + $0x58] sm:$0xff]
        %v353 = vld [vmem:[#allocation5 + $0x60] sm:$0x33]
        %v354 = vld [vmem:[%s2] sm:$0x3]
        %v356 = vlaneseq
        %v357 = vshrl.u32 %v356, 7
        %v358 = vsub.s32 0, %v357
        %v359 = vrot.slane %v354, %v358
        %v360 = vlaneseq
        %v361 = vshrl.u32 %v360, 7
        %v362 = vsub.s32 1, %v361
        %v363 = vrot.slane %v354, %v362
        %v379 = vunpack.c.l.b16 %v341
        %v380 = vunpack.c.h.b16 %v341
        %v381 = vunpack.c.l.b16 %v342
        %v382 = vunpack.c.h.b16 %v342
        %v383 = vunpack.c.l.b16 %v343
        %v384 = vunpack.c.h.b16 %v343
        %v385 = vunpack.c.l.b16 %v344
        %v386 = vunpack.c.h.b16 %v344
        %v387 = vunpack.c.l.b16 %v345
        %v388 = vunpack.c.h.b16 %v345
        %v389 = vunpack.c.l.b16 %v346
        %v390 = vunpack.c.h.b16 %v346
        %v391 = vunpack.c.l.b16 %v347
        %v392 = vunpack.c.h.b16 %v347
        %v393 = vunpack.c.l.b16 %v348
        %v394 = vunpack.c.h.b16 %v348
        %v395 = vunpack.c.l.b16 %v349
        %v396 = vunpack.c.h.b16 %v349
        %v397 = vunpack.c.l.b16 %v350
        %v398 = vunpack.c.h.b16 %v350
        %v399 = vunpack.c.l.b16 %v351
        %v400 = vunpack.c.h.b16 %v351
        %v401 = vunpack.c.l.b16 %v352
        %v402 = vunpack.c.h.b16 %v352
        %v403 = vunpack.c.l.b16 %v353
        %v404 = vunpack.c.h.b16 %v353
        %v405 = vpack.c.b16 %v381, %v379
        %v406 = vpack.c.b16 %v382, %v380
        %v407 = vpack.c.b16 %v385, %v383
        %v408 = vpack.c.b16 %v386, %v384
        %v409 = vpack.c.b16 %v389, %v387
        %v410 = vpack.c.b16 %v390, %v388
        %v411 = vpack.c.b16 %v393, %v391
        %v412 = vpack.c.b16 %v394, %v392
        %v413 = vpack.c.b16 %v397, %v395
        %v414 = vpack.c.b16 %v398, %v396
        %v415 = vpack.c.b16 %v401, %v399
        %v416 = vpack.c.b16 %v402, %v400
        %v417 = vpack.c.b16 %v403, %v403
        %v418 = vpack.c.b16 %v404, %v404
        %vm431 = vcmask 818176
        %v433 = vsel %vm431, %v340, 0
        %vm435 = vcmask 1041408
        %v437 = vsel %vm435, %v417, 0
        %v440 = vsel %vm435, %v418, 0
        %442 = vmatprep.subr.bf16.mxu0 %v406
        %443 = vmatpush1.bf16.msra.mxu0 %v405
        %444 = vmatprep.subr.bf16.mxu0 %v408
        %445 = vmatpush1.bf16.msra.mxu0 %v407
        %446 = vmatprep.subr.bf16.mxu0 %v410
        %447 = vmatpush1.bf16.msra.mxu0 %v409
        %448 = vmatprep.subr.bf16.mxu0 %v412
        %449 = vmatpush1.bf16.msra.mxu0 %v411
        %450 = vmatprep.subr.bf16.mxu0 %v414
        %451 = vmatpush1.bf16.msra.mxu0 %v413
        %452 = vmatprep.subr.bf16.mxu0 %v416
        %453 = vmatpush1.bf16.msra.mxu0 %v415
        %454 = vmatprep.subr.bf16.mxu0 %v440
        %455 = vmatpush1.bf16.msra.mxu0 %v437
        %456 = vmatprep.subr.bf16.mxu0 0
        %457 = vmatpush1.bf16.msra.mxu0 0
        %458 = vmatprep.subr.bf16.mxu0 0
        %459 = vmatpush1.bf16.msra.mxu0 0
        %460 = vmatprep.subr.bf16.mxu0 0
        %461 = vmatpush1.bf16.msra.mxu0 0
        %462 = vmatprep.subr.bf16.mxu0 0
        %463 = vmatpush1.bf16.msra.mxu0 0
        %464 = vmatprep.subr.bf16.mxu0 0
        %465 = vmatpush1.bf16.msra.mxu0 0
        %466 = vmatprep.subr.bf16.mxu0 0
        %467 = vmatpush1.bf16.msra.mxu0 0
        %468 = vmatprep.subr.bf16.mxu0 0
        %469 = vmatpush1.bf16.msra.mxu0 0
        %470 = vmatprep.subr.bf16.mxu0 0
        %471 = vmatpush1.bf16.msra.mxu0 0
        %472 = vmatprep.subr.bf16.mxu0 0
        %473 = vmatpush1.bf16.msra.mxu0 0
        %474 = vmatprep.mubr.bf16.mxu0 0
        %475 = vmatmul.mubr.bf16.gmra.mrb[0].mxu0 %v433
        %v476 = vpop.f32.mrb[0].mxu0
        %v477 = vadd.f32 %v359, %v476
        %v478 = vpop.f32.mrb[0].mxu0
        %v479 = vadd.f32 %v363, %v478
        %v480 = vpop.f32.mrb[0].mxu0
        %v481 = vpop.f32.mrb[0].mxu0
        %482 = vdwg.mxu0
        %v483 = vmax.f32 %v477, 0.0
        %v484 = vmax.f32 %v479, 0.0
        %v485 = vpack.c.bf16 %v483, %v483
        %v486 = vpack.c.bf16 %v484, %v484
        %v487 = vld [vmem:[#allocation7] sm:$0xff]
        %v488 = vld [vmem:[#allocation7 + $0x8] sm:$0xff]
        %v489 = vld [vmem:[#allocation7 + $0x10] sm:$0xff]
        %v490 = vld [vmem:[#allocation7 + $0x18] sm:$0xff]
        %v491 = vld [vmem:[#allocation7 + $0x20] sm:$0xff]
        %v492 = vld [vmem:[#allocation7 + $0x28] sm:$0xff]
        %v493 = vld [vmem:[#allocation7 + $0x30] sm:$0xff]
        %v494 = vld [vmem:[#allocation7 + $0x38] sm:$0xff]
        %v495 = vld [vmem:[#allocation7 + $0x40] sm:$0xff]
        %v496 = vld [vmem:[#allocation7 + $0x48] sm:$0xff]
        %v497 = vld [vmem:[#allocation7 + $0x50] sm:$0xff]
        %v498 = vld [vmem:[#allocation7 + $0x58] sm:$0xff]
        %v499 = vld [vmem:[#allocation7 + $0x60] sm:$0xff]
        %v500 = vld [vmem:[#allocation7 + $0x68] sm:$0xff]
        %v501 = vld [vmem:[#allocation7 + $0x70] sm:$0xff]
        %v502 = vld [vmem:[#allocation7 + $0x78] sm:$0xff]
        %v503 = vld [vmem:[#allocation7 + $0x80] sm:$0xff]
        %v504 = vld [vmem:[#allocation7 + $0x88] sm:$0xff]
        %v505 = vld [vmem:[#allocation7 + $0x90] sm:$0xff]
        %v506 = vld [vmem:[#allocation7 + $0x98] sm:$0xff]
        %v507 = vld [vmem:[#allocation7 + $0xa0] sm:$0xff]
        %v508 = vld [vmem:[#allocation7 + $0xa8] sm:$0xff]
        %v509 = vld [vmem:[#allocation7 + $0xb0] sm:$0xff]
        %v510 = vld [vmem:[#allocation7 + $0xb8] sm:$0xff]
        %v511 = vld [vmem:[#allocation7 + $0xc0] sm:$0xff]
        %v512 = vld [vmem:[#allocation7 + $0xc8] sm:$0xff]
        %v513 = vld [vmem:[#allocation7 + $0xd0] sm:$0xff]
        %v514 = vld [vmem:[#allocation7 + $0xd8] sm:$0xff]
        %v515 = vld [vmem:[#allocation7 + $0xe0] sm:$0xff]
        %v516 = vld [vmem:[#allocation7 + $0xe8] sm:$0xff]
        %v517 = vld [vmem:[#allocation7 + $0xf0] sm:$0xff]
        %v518 = vld [vmem:[#allocation7 + $0xf8] sm:$0xff]
        %v519 = vld [vmem:[%s4] sm:$0x3]
        %v521 = vlaneseq
        %v522 = vshrl.u32 %v521, 7
        %v523 = vsub.s32 0, %v522
        %v524 = vrot.slane %v519, %v523
        %v525 = vlaneseq
        %v526 = vshrl.u32 %v525, 7
        %v527 = vsub.s32 1, %v526
        %v528 = vrot.slane %v519, %v527
        %v563 = vunpack.c.l.b16 %v487
        %v564 = vunpack.c.h.b16 %v487
        %v565 = vunpack.c.l.b16 %v488
        %v566 = vunpack.c.h.b16 %v488
        %v567 = vunpack.c.l.b16 %v489
        %v568 = vunpack.c.h.b16 %v489
        %v569 = vunpack.c.l.b16 %v490
        %v570 = vunpack.c.h.b16 %v490
        %v571 = vunpack.c.l.b16 %v491
        %v572 = vunpack.c.h.b16 %v491
        %v573 = vunpack.c.l.b16 %v492
        %v574 = vunpack.c.h.b16 %v492
        %v575 = vunpack.c.l.b16 %v493
        %v576 = vunpack.c.h.b16 %v493
        %v577 = vunpack.c.l.b16 %v494
        %v578 = vunpack.c.h.b16 %v494
        %v579 = vunpack.c.l.b16 %v495
        %v580 = vunpack.c.h.b16 %v495
        %v581 = vunpack.c.l.b16 %v496
        %v582 = vunpack.c.h.b16 %v496
        %v583 = vunpack.c.l.b16 %v497
        %v584 = vunpack.c.h.b16 %v497
        %v585 = vunpack.c.l.b16 %v498
        %v586 = vunpack.c.h.b16 %v498
        %v587 = vunpack.c.l.b16 %v499
        %v588 = vunpack.c.h.b16 %v499
        %v589 = vunpack.c.l.b16 %v500
        %v590 = vunpack.c.h.b16 %v500
        %v591 = vunpack.c.l.b16 %v501
        %v592 = vunpack.c.h.b16 %v501
        %v593 = vunpack.c.l.b16 %v502
        %v594 = vunpack.c.h.b16 %v502
        %v595 = vunpack.c.l.b16 %v503
        %v596 = vunpack.c.h.b16 %v503
        %v597 = vunpack.c.l.b16 %v504
        %v598 = vunpack.c.h.b16 %v504
        %v599 = vunpack.c.l.b16 %v505
        %v600 = vunpack.c.h.b16 %v505
        %v601 = vunpack.c.l.b16 %v506
        %v602 = vunpack.c.h.b16 %v506
        %v603 = vunpack.c.l.b16 %v507
        %v604 = vunpack.c.h.b16 %v507
        %v605 = vunpack.c.l.b16 %v508
        %v606 = vunpack.c.h.b16 %v508
        %v607 = vunpack.c.l.b16 %v509
        %v608 = vunpack.c.h.b16 %v509
        %v609 = vunpack.c.l.b16 %v510
        %v610 = vunpack.c.h.b16 %v510
        %v611 = vunpack.c.l.b16 %v511
        %v612 = vunpack.c.h.b16 %v511
        %v613 = vunpack.c.l.b16 %v512
        %v614 = vunpack.c.h.b16 %v512
        %v615 = vunpack.c.l.b16 %v513
        %v616 = vunpack.c.h.b16 %v513
        %v617 = vunpack.c.l.b16 %v514
        %v618 = vunpack.c.h.b16 %v514
        %v619 = vunpack.c.l.b16 %v515
        %v620 = vunpack.c.h.b16 %v515
        %v621 = vunpack.c.l.b16 %v516
        %v622 = vunpack.c.h.b16 %v516
        %v623 = vunpack.c.l.b16 %v517
        %v624 = vunpack.c.h.b16 %v517
        %v625 = vunpack.c.l.b16 %v518
        %v626 = vunpack.c.h.b16 %v518
        %v627 = vpack.c.b16 %v565, %v563
        %v628 = vpack.c.b16 %v566, %v564
        %v629 = vpack.c.b16 %v569, %v567
        %v630 = vpack.c.b16 %v570, %v568
        %v631 = vpack.c.b16 %v573, %v571
        %v632 = vpack.c.b16 %v574, %v572
        %v633 = vpack.c.b16 %v577, %v575
        %v634 = vpack.c.b16 %v578, %v576
        %v635 = vpack.c.b16 %v581, %v579
        %v636 = vpack.c.b16 %v582, %v580
        %v637 = vpack.c.b16 %v585, %v583
        %v638 = vpack.c.b16 %v586, %v584
        %v639 = vpack.c.b16 %v589, %v587
        %v640 = vpack.c.b16 %v590, %v588
        %v641 = vpack.c.b16 %v593, %v591
        %v642 = vpack.c.b16 %v594, %v592
        %v643 = vpack.c.b16 %v597, %v595
        %v644 = vpack.c.b16 %v598, %v596
        %v645 = vpack.c.b16 %v601, %v599
        %v646 = vpack.c.b16 %v602, %v600
        %v647 = vpack.c.b16 %v605, %v603
        %v648 = vpack.c.b16 %v606, %v604
        %v649 = vpack.c.b16 %v609, %v607
        %v650 = vpack.c.b16 %v610, %v608
        %v651 = vpack.c.b16 %v613, %v611
        %v652 = vpack.c.b16 %v614, %v612
        %v653 = vpack.c.b16 %v617, %v615
        %v654 = vpack.c.b16 %v618, %v616
        %v655 = vpack.c.b16 %v621, %v619
        %v656 = vpack.c.b16 %v622, %v620
        %v657 = vpack.c.b16 %v625, %v623
        %v658 = vpack.c.b16 %v626, %v624
        %691 = vmatprep.subr.bf16.mxu0 %v628
        %692 = vmatpush1.bf16.msra.mxu0 %v627
        %693 = vmatprep.subr.bf16.mxu0 %v630
        %694 = vmatpush1.bf16.msra.mxu0 %v629
        %695 = vmatprep.subr.bf16.mxu0 %v632
        %696 = vmatpush1.bf16.msra.mxu0 %v631
        %697 = vmatprep.subr.bf16.mxu0 %v634
        %698 = vmatpush1.bf16.msra.mxu0 %v633
        %699 = vmatprep.subr.bf16.mxu0 %v636
        %700 = vmatpush1.bf16.msra.mxu0 %v635
        %701 = vmatprep.subr.bf16.mxu0 %v638
        %702 = vmatpush1.bf16.msra.mxu0 %v637
        %703 = vmatprep.subr.bf16.mxu0 %v640
        %704 = vmatpush1.bf16.msra.mxu0 %v639
        %705 = vmatprep.subr.bf16.mxu0 %v642
        %706 = vmatpush1.bf16.msra.mxu0 %v641
        %707 = vmatprep.subr.bf16.mxu0 %v644
        %708 = vmatpush1.bf16.msra.mxu0 %v643
        %709 = vmatprep.subr.bf16.mxu0 %v646
        %710 = vmatpush1.bf16.msra.mxu0 %v645
        %711 = vmatprep.subr.bf16.mxu0 %v648
        %712 = vmatpush1.bf16.msra.mxu0 %v647
        %713 = vmatprep.subr.bf16.mxu0 %v650
        %714 = vmatpush1.bf16.msra.mxu0 %v649
        %715 = vmatprep.subr.bf16.mxu0 %v652
        %716 = vmatpush1.bf16.msra.mxu0 %v651
        %717 = vmatprep.subr.bf16.mxu0 %v654
        %718 = vmatpush1.bf16.msra.mxu0 %v653
        %719 = vmatprep.subr.bf16.mxu0 %v656
        %720 = vmatpush1.bf16.msra.mxu0 %v655
        %721 = vmatprep.subr.bf16.mxu0 %v658
        %722 = vmatpush1.bf16.msra.mxu0 %v657
        %723 = vmatprep.mubr.bf16.mxu0 %v486
        %724 = vmatmul.mubr.bf16.gmra.mrb[0].mxu0 %v485
        %v725 = vpop.f32.mrb[0].mxu0
        %v726 = vadd.f32 %v524, %v725
        %v727 = vpop.f32.mrb[0].mxu0
        %v728 = vadd.f32 %v528, %v727
        %v729 = vpop.f32.mrb[0].mxu0
        %v730 = vpop.f32.mrb[0].mxu0
        %731 = vdwg.mxu0
        %v732 = vmax.f32 %v726, 0.0
        %v733 = vmax.f32 %v728, 0.0
        %v734 = vpack.c.bf16 %v732, %v732
        %v735 = vpack.c.bf16 %v733, %v733
        %v736 = vld [vmem:[#allocation8] sm:$0xf]
        %v737 = vld [vmem:[#allocation8 + $0x4] sm:$0xf]
        %v738 = vld [vmem:[#allocation8 + $0x8] sm:$0xf]
        %v739 = vld [vmem:[#allocation8 + $0xc] sm:$0xf]
        %v740 = vld [vmem:[#allocation8 + $0x10] sm:$0xf]
        %v741 = vld [vmem:[#allocation8 + $0x14] sm:$0xf]
        %v742 = vld [vmem:[#allocation8 + $0x18] sm:$0xf]
        %v743 = vld [vmem:[#allocation8 + $0x1c] sm:$0xf]
        %v744 = vld [vmem:[#allocation8 + $0x20] sm:$0xf]
        %v745 = vld [vmem:[#allocation8 + $0x24] sm:$0xf]
        %v746 = vld [vmem:[#allocation8 + $0x28] sm:$0xf]
        %v747 = vld [vmem:[#allocation8 + $0x2c] sm:$0xf]
        %v748 = vld [vmem:[#allocation8 + $0x30] sm:$0xf]
        %v749 = vld [vmem:[#allocation8 + $0x34] sm:$0xf]
        %v750 = vld [vmem:[#allocation8 + $0x38] sm:$0xf]
        %v751 = vld [vmem:[#allocation8 + $0x3c] sm:$0xf]
        %v752 = vld [vmem:[#allocation8 + $0x40] sm:$0xf]
        %v753 = vld [vmem:[#allocation8 + $0x44] sm:$0xf]
        %v754 = vld [vmem:[#allocation8 + $0x48] sm:$0xf]
        %v755 = vld [vmem:[#allocation8 + $0x4c] sm:$0xf]
        %v756 = vld [vmem:[#allocation8 + $0x50] sm:$0xf]
        %v757 = vld [vmem:[#allocation8 + $0x54] sm:$0xf]
        %v758 = vld [vmem:[#allocation8 + $0x58] sm:$0xf]
        %v759 = vld [vmem:[#allocation8 + $0x5c] sm:$0xf]
        %v760 = vld [vmem:[#allocation8 + $0x60] sm:$0xf]
        %v761 = vld [vmem:[#allocation8 + $0x64] sm:$0xf]
        %v762 = vld [vmem:[#allocation8 + $0x68] sm:$0xf]
        %v763 = vld [vmem:[#allocation8 + $0x6c] sm:$0xf]
        %v764 = vld [vmem:[#allocation8 + $0x70] sm:$0xf]
        %v765 = vld [vmem:[#allocation8 + $0x74] sm:$0xf]
        %v766 = vld [vmem:[#allocation8 + $0x78] sm:$0xf]
        %v767 = vld [vmem:[#allocation8 + $0x7c] sm:$0xf]
        %v768 = vld [vmem:[%s6] sm:$0x1]
        %v770 = vlaneseq
        %v771 = vshrl.u32 %v770, 7
        %v772 = vsub.s32 0, %v771
        %v773 = vrot.slane %v768, %v772
        %v807 = vunpack.c.l.b16 %v736
        %v808 = vunpack.c.l.b16 %v737
        %v809 = vunpack.c.l.b16 %v738
        %v810 = vunpack.c.l.b16 %v739
        %v811 = vunpack.c.l.b16 %v740
        %v812 = vunpack.c.l.b16 %v741
        %v813 = vunpack.c.l.b16 %v742
        %v814 = vunpack.c.l.b16 %v743
        %v815 = vunpack.c.l.b16 %v744
        %v816 = vunpack.c.l.b16 %v745
        %v817 = vunpack.c.l.b16 %v746
        %v818 = vunpack.c.l.b16 %v747
        %v819 = vunpack.c.l.b16 %v748
        %v820 = vunpack.c.l.b16 %v749
        %v821 = vunpack.c.l.b16 %v750
        %v822 = vunpack.c.l.b16 %v751
        %v823 = vunpack.c.l.b16 %v752
        %v824 = vunpack.c.l.b16 %v753
        %v825 = vunpack.c.l.b16 %v754
        %v826 = vunpack.c.l.b16 %v755
        %v827 = vunpack.c.l.b16 %v756
        %v828 = vunpack.c.l.b16 %v757
        %v829 = vunpack.c.l.b16 %v758
        %v830 = vunpack.c.l.b16 %v759
        %v831 = vunpack.c.l.b16 %v760
        %v832 = vunpack.c.l.b16 %v761
        %v833 = vunpack.c.l.b16 %v762
        %v834 = vunpack.c.l.b16 %v763
        %v835 = vunpack.c.l.b16 %v764
        %v836 = vunpack.c.l.b16 %v765
        %v837 = vunpack.c.l.b16 %v766
        %v838 = vunpack.c.l.b16 %v767
        %v839 = vpack.c.b16 %v808, %v807
        %v840 = vpack.c.b16 %v810, %v809
        %v841 = vpack.c.b16 %v812, %v811
        %v842 = vpack.c.b16 %v814, %v813
        %v843 = vpack.c.b16 %v816, %v815
        %v844 = vpack.c.b16 %v818, %v817
        %v845 = vpack.c.b16 %v820, %v819
        %v846 = vpack.c.b16 %v822, %v821
        %v847 = vpack.c.b16 %v824, %v823
        %v848 = vpack.c.b16 %v826, %v825
        %v849 = vpack.c.b16 %v828, %v827
        %v850 = vpack.c.b16 %v830, %v829
        %v851 = vpack.c.b16 %v832, %v831
        %v852 = vpack.c.b16 %v834, %v833
        %v853 = vpack.c.b16 %v836, %v835
        %v854 = vpack.c.b16 %v838, %v837
        %871 = vmatprep.subr.bf16.mxu0 0
        %872 = vmatpush1.bf16.msra.mxu0 %v839
        %873 = vmatprep.subr.bf16.mxu0 0
        %874 = vmatpush1.bf16.msra.mxu0 %v840
        %875 = vmatprep.subr.bf16.mxu0 0
        %876 = vmatpush1.bf16.msra.mxu0 %v841
        %877 = vmatprep.subr.bf16.mxu0 0
        %878 = vmatpush1.bf16.msra.mxu0 %v842
        %879 = vmatprep.subr.bf16.mxu0 0
        %880 = vmatpush1.bf16.msra.mxu0 %v843
        %881 = vmatprep.subr.bf16.mxu0 0
        %882 = vmatpush1.bf16.msra.mxu0 %v844
        %883 = vmatprep.subr.bf16.mxu0 0
        %884 = vmatpush1.bf16.msra.mxu0 %v845
        %885 = vmatprep.subr.bf16.mxu0 0
        %886 = vmatpush1.bf16.msra.mxu0 %v846
        %887 = vmatprep.subr.bf16.mxu0 0
        %888 = vmatpush1.bf16.msra.mxu0 %v847
        %889 = vmatprep.subr.bf16.mxu0 0
        %890 = vmatpush1.bf16.msra.mxu0 %v848
        %891 = vmatprep.subr.bf16.mxu0 0
        %892 = vmatpush1.bf16.msra.mxu0 %v849
        %893 = vmatprep.subr.bf16.mxu0 0
        %894 = vmatpush1.bf16.msra.mxu0 %v850
        %895 = vmatprep.subr.bf16.mxu0 0
        %896 = vmatpush1.bf16.msra.mxu0 %v851
        %897 = vmatprep.subr.bf16.mxu0 0
        %898 = vmatpush1.bf16.msra.mxu0 %v852
        %899 = vmatprep.subr.bf16.mxu0 0
        %900 = vmatpush1.bf16.msra.mxu0 %v853
        %901 = vmatprep.subr.bf16.mxu0 0
        %902 = vmatpush1.bf16.msra.mxu0 %v854
        %903 = vmatprep.mubr.bf16.mxu0 %v735
        %904 = vmatmul.mubr.bf16.gmra.mrb[0].mxu0 %v734
        %v905 = vpop.f32.mrb[0].mxu0
        %v906 = vadd.f32 %v773, %v905
        %v907 = vpop.f32.mrb[0].mxu0
        %v908 = vpop.f32.mrb[0].mxu0
        %v909 = vpop.f32.mrb[0].mxu0
        %910 = vdwg.mxu0
        %911 = vst [vmem:[%s337] sm:$0xff] %v906
        %s912 = sand.u32 %s186, 1
        %s913 = scalar_lea.sflag [#allocation4], %s912
        %s914 = sand.u32 %s186, 1
        %s915 = smul.addr %s914, 8
        %s916 = scalar_lea.vmem [#allocation10], %s915
        // Predicated region
        $region65: #{tpu_custom_call.1} parent=47 // pred_check
          %p917 = pneg %p196
        $region66: #{tpu_custom_call.1} parent=47 // pred_check_branch
          %919 = sbr.rel (%p917) target = $region68
        $region67: #{tpu_custom_call.1} parent=47 // pred_region
          %s921 = ssub.s32 128, 128
          %922 = vsyncadd %s913, %s921
          %s923 = smul.addr %s26, 128
          %s924 = scalar_lea.hbm %s7, %s923
          %s926 = sshll.u32 %s916, 4
          %s927 = int_to_ptr.vmem [resolvable:$true] %s926
          %929 = dma.vmem_to_hbm [thread:$0]  %s927, 128, %s924, %s913
        $region68: #{tpu_custom_call.1} parent=47 // pred_fallthru
          _
      $region48: #{tpu_custom_call.1} parent=5 // pred_fallthru
        _
      %p930 = scmp.le.s32.totalorder 2, %s21
      // Predicated region
      $region69: #{tpu_custom_call.1} parent=5 // pred_check
        %p931 = pneg %p930
      $region70: #{tpu_custom_call.1} parent=5 // pred_check_branch
        %933 = sbr.rel (%p931) target = $region72
      $region71: #{tpu_custom_call.1} parent=5 // pred_region
        %s934 = ssub.s32 %s21, 2
        // Predicated region
        $region73: #{tpu_custom_call.1} parent=71 // pred_check
          %p935 = pneg %p202
        $region74: #{tpu_custom_call.1} parent=71 // pred_check_branch
          %937 = sbr.rel (%p935) target = $region76
        $region75: #{tpu_custom_call.1} parent=71 // pred_region
          %s938 = sand.u32 %s187, 1
          %s939 = scalar_lea.sflag [#allocation4], %s938
          %s940 = sand.u32 %s187, 1
          %s941 = smul.addr %s940, 8
          %s942 = scalar_lea.vmem [#allocation10], %s941
          %943 = dma.done %s939, 128
        $region76: #{tpu_custom_call.1} parent=71 // pred_fallthru
          _
      $region72: #{tpu_custom_call.1} parent=5 // pred_fallthru
        _
    $region6: #{tpu_custom_call.1} parent=1 // loop_footer
      %s25 = sadd.s32 1, %s21
    $region7: #{tpu_custom_call.1} parent=1 // loop_footer_branch
      %20 = sbr.rel target = $region3
    $region8: #{tpu_custom_call.1} parent=1 // loop_exit
      _
    %944 = vsyncpa [#allocation3], 1
    %s945 = scalar_lea.sflag [#allocation3], 1
    %946 = vsyncpa %s945, 1
    %947 = vsyncpa [#allocation6], 1
    %948 = vsyncpa [#allocation9], 1
    %949 = vsyncpa [#allocation4], 1
    %s950 = scalar_lea.sflag [#allocation4], 1
    %951 = vsyncpa %s950, 1

</llo_original>
